<compile_context>
chip_gen: v7x
topology: tpu7x:2x2x1
jax: 0.10.0
libtpu: 0.0.40
codegen_flags: <defaults>
</compile_context>

<pallas_src>
import jax
import jax.numpy as jnp
from jax.experimental import pallas as pl
from jax.experimental.pallas import tpu as pltpu


def _logreg_kernel(params_ref, x0_ref, x1_ref, o_ref):
    # params_ref : SMEM f32[3] = [w0, w1, b]   (scalar-prefetched, loop-invariant)
    # x0_ref/x1_ref : VMEM (block_r, C) feature planes, batch on sublanes+lanes
    # o_ref      : VMEM (block_r, C) lane-dense sigmoid output
    w0 = params_ref[0]
    w1 = params_ref[1]
    b = params_ref[2]

    x0 = x0_ref[...].astype(jnp.float32)  # in-kernel upcast (v5e has no bf16 VPU/EUP)
    x1 = x1_ref[...].astype(jnp.float32)

    # z = x @ W^T + b as pure VPU elementwise work on full (8,128) vregs.
    z = x0 * w0 + x1 * w1 + b
    # Exact, numerically stable sigmoid with a single EUP op per element.
    sig = 0.5 * jnp.tanh(0.5 * z) + 0.5
    o_ref[...] = sig.astype(o_ref.dtype)


def logistic_regression(x, w, b):
    """x: (N, 2) float, w: (1, 2), b: (1,). Returns sigmoid(x @ w.T + b): (N, 1) f32."""
    n, f = x.shape
    assert f == 2 and w.shape == (1, f) and b.shape == (1,)

    # --- layout: pack the batch into a (R, C) slab (sublanes x lanes) ----------
    C = max(128, min(1024, pl.cdiv(n, 128) * 128))        # lanes, multiple of 128
    rows_needed = pl.cdiv(n, C)
    # Target ~1 MiB per input plane per grid step at large N (256*1024*4B),
    # while small N collapses to a single 8-row block. block_r stays a multiple of 8.
    block_r = min(256, pl.cdiv(rows_needed, 8) * 8)
    R = pl.cdiv(rows_needed, block_r) * block_r            # rows, multiple of block_r
    grid_r = R // block_r
    total = R * C

    # Feature-major planes. Padding value is irrelevant (cropped after the call).
    # TODO(synk): accept feature-major / (R,C)-shaped input from the producer to
    # avoid these wrapper-side pad/reshape copies entirely.
    x0p = jnp.pad(x[:, 0], (0, total - n)).reshape(R, C)
    x1p = jnp.pad(x[:, 1], (0, total - n)).reshape(R, C)

    # Scalar-prefetch params: [w0, w1, b] in SMEM, read once per step as scalars.
    params = jnp.concatenate(
        [w.reshape(-1).astype(jnp.float32), b.reshape(-1).astype(jnp.float32)]
    )  # (3,)

    itemsize = jnp.dtype(x.dtype).itemsize
    cost = pl.CostEstimate(
        flops=4 * total,                 # 2 mul + 2 add per sample
        transcendentals=total,           # one tanh per sample
        bytes_accessed=2 * total * itemsize + total * 4 + params.size * 4,
    )

    out = pl.pallas_call(
        _logreg_kernel,
        out_shape=jax.ShapeDtypeStruct((R, C), jnp.float32),
        grid_spec=pltpu.PrefetchScalarGridSpec(
            num_scalar_prefetch=1,
            grid=(grid_r,),
            in_specs=[
                pl.BlockSpec((block_r, C), lambda i, p: (i, 0)),  # x0 plane tile
                pl.BlockSpec((block_r, C), lambda i, p: (i, 0)),  # x1 plane tile
            ],
            out_specs=pl.BlockSpec((block_r, C), lambda i, p: (i, 0)),
        ),
        compiler_params=pltpu.CompilerParams(
            dimension_semantics=("parallel",),  # shard rows across v7x's 2 TCs
        ),
        cost_estimate=cost,
    )(params, x0p, x1p)

    # Crop padding, restore (N, 1) to match torch.nn.Linear(2, 1) output shape.
    return out.reshape(total)[:n].reshape(n, 1)


if __name__ == "__main__":
    key = jax.random.PRNGKey(0)
    k_x0, k_x1, k_w, k_b = jax.random.split(key, 4)

    # Mirror the PyTorch data construction:
    # x0 ~ N(+2, 1), x1 ~ N(-2, 1), each (100, 2), concatenated along dim 0.
    n_per = 100
    x0 = 2.0 + jax.random.normal(k_x0, (n_per, 2), dtype=jnp.float32)
    x1 = -2.0 + jax.random.normal(k_x1, (n_per, 2), dtype=jnp.float32)
    x = jnp.concatenate([x0, x1], axis=0)  # (200, 2) float32

    # torch.nn.Linear(2, 1) init: weight (1, 2), bias (1,), U(-1/sqrt(2), 1/sqrt(2))
    bound = 1.0 / jnp.sqrt(2.0)
    w = jax.random.uniform(k_w, (1, 2), minval=-bound, maxval=bound, dtype=jnp.float32)
    b = jax.random.uniform(k_b, (1,), minval=-bound, maxval=bound, dtype=jnp.float32)

    out = logistic_regression(x, w, b)
    jax.block_until_ready(out)

    # Exact sigmoid in-kernel -> tight tolerance vs plain-JAX reference.
    ref = jax.nn.sigmoid(x @ w.T + b)
    assert out.shape == (2 * n_per, 1)
    assert jnp.allclose(out, ref, atol=1e-5), "mismatch vs reference"

    print("KERNEL_OK")
</pallas_src>

<mosaic_0001>
module attributes {stable_mosaic.version = 11 : i64} {
  func.func @_logreg_kernel(%arg0: i32, %arg1: memref<3xf32, #tpu.memory_space<smem>>, %arg2: memref<8x256xf32, #tpu.memory_space<vmem>>, %arg3: memref<8x256xf32, #tpu.memory_space<vmem>>, %arg4: memref<8x256xf32, #tpu.memory_space<vmem>>) attributes {dimension_semantics = [#tpu.dimension_semantics<parallel>], iteration_bounds = array<i64: 1>, scalar_prefetch = 1 : i64, scratch_operands = 0 : i64, tpu.core_type = #tpu.core_type<tc>, window_params = [{transform_indices = @transform_0, window_bounds = array<i64: 8, 256>}, {transform_indices = @transform_1, window_bounds = array<i64: 8, 256>}, {transform_indices = @transform_2, window_bounds = array<i64: 8, 256>}]} {
    %c0 = arith.constant 0 : index
    %0 = memref.load %arg1[%c0] : memref<3xf32, #tpu.memory_space<smem>>
    %c1 = arith.constant 1 : index
    %1 = memref.load %arg1[%c1] : memref<3xf32, #tpu.memory_space<smem>>
    %c2 = arith.constant 2 : index
    %2 = memref.load %arg1[%c2] : memref<3xf32, #tpu.memory_space<smem>>
    %c0_0 = arith.constant 0 : index
    %c0_1 = arith.constant 0 : index
    %3 = vector.load %arg2[%c0_0, %c0_1] : memref<8x256xf32, #tpu.memory_space<vmem>>, vector<8x256xf32>
    %c0_2 = arith.constant 0 : index
    %c0_3 = arith.constant 0 : index
    %4 = vector.load %arg3[%c0_2, %c0_3] : memref<8x256xf32, #tpu.memory_space<vmem>>, vector<8x256xf32>
    %5 = vector.broadcast %0 : f32 to vector<8x256xf32>
    %6 = arith.mulf %3, %5 : vector<8x256xf32>
    %7 = vector.broadcast %1 : f32 to vector<8x256xf32>
    %8 = arith.mulf %4, %7 : vector<8x256xf32>
    %9 = arith.addf %6, %8 : vector<8x256xf32>
    %10 = vector.broadcast %2 : f32 to vector<8x256xf32>
    %11 = arith.addf %9, %10 : vector<8x256xf32>
    %cst = arith.constant 5.000000e-01 : f32
    %12 = vector.broadcast %cst : f32 to vector<8x256xf32>
    %13 = arith.mulf %12, %11 : vector<8x256xf32>
    %14 = math.tanh %13 : vector<8x256xf32>
    %cst_4 = arith.constant 5.000000e-01 : f32
    %15 = vector.broadcast %cst_4 : f32 to vector<8x256xf32>
    %16 = arith.mulf %15, %14 : vector<8x256xf32>
    %cst_5 = arith.constant 5.000000e-01 : f32
    %17 = vector.broadcast %cst_5 : f32 to vector<8x256xf32>
    %18 = arith.addf %16, %17 : vector<8x256xf32>
    %c0_6 = arith.constant 0 : index
    %c0_7 = arith.constant 0 : index
    %19 = vector.load %arg4[%c0_6, %c0_7] : memref<8x256xf32, #tpu.memory_space<vmem>>, vector<8x256xf32>
    tpu.vector_store %arg4[%c0_6, %c0_7], %18 {strides = array<i32>} : memref<8x256xf32, #tpu.memory_space<vmem>>, vector<8x256xf32>,
    return
  }
  func.func @transform_0(%arg0: i32, %arg1: memref<3xf32, #tpu.memory_space<smem>>) -> (i32, i32) {
    %c0_i32 = arith.constant 0 : i32
    %c0_i32_0 = arith.constant 0 : i32
    return %arg0, %c0_i32 : i32, i32
  }
  func.func @transform_1(%arg0: i32, %arg1: memref<3xf32, #tpu.memory_space<smem>>) -> (i32, i32) {
    %c0_i32 = arith.constant 0 : i32
    %c0_i32_0 = arith.constant 0 : i32
    return %arg0, %c0_i32 : i32, i32
  }
  func.func @transform_2(%arg0: i32, %arg1: memref<3xf32, #tpu.memory_space<smem>>) -> (i32, i32) {
    %c0_i32 = arith.constant 0 : i32
    %c0_i32_0 = arith.constant 0 : i32
    return %arg0, %c0_i32 : i32, i32
  }
}

</mosaic_0001>

<llo_original>
// kernel: tpu_custom_call.1
$region0: #{tpu_custom_call.1}
  #allocation0 [shape = 'u32[]', space=smem, size = 0x4, offset = 0x4, fixed_abs, tag = 'smem constant byte address 0x4 - core index']
  #allocation1 [shape = 'u32[144,128]{1,0:T(1,128)}', space=vmem, size = 0x12000, scoped, tag = 'internal scratch']
  #allocation2 [shape = 's32[1]{0}', space=sflag, size = 0x4, scoped, tag = 'scoped memory for tpu_custom_call.1']
  #allocation3 [shape = 'u8[512]{0}', space=smem, size = 0x200, scoped, tag = 'prefetched SMEM operand 0']
  %s0 = inlined_call_operand.hbm [shape: f32[3], index: 0, kind: input, shape index: {}]
  %s1 = inlined_call_operand.hbm [shape: f32[8,256], index: 1, kind: input, shape index: {}]
  %s2 = inlined_call_operand.hbm [shape: f32[8,256], index: 2, kind: input, shape index: {}]
  %s3 = inlined_call_operand.hbm [shape: f32[8,256], index: 3, kind: output, shape index: {}]
  %s4 = sld [smem:[#allocation0]]
  $region26: #{tpu_custom_call.1} parent=0
    _
  %s6 = ssub.s32 1, %s4
  %s7 = scalar_select 0, %s6, %s4
  %9 = dma.hbm_to_smem %s0, 16, [#allocation3], [#allocation2]
  %10 = dma.done [#allocation2], 16
  %11 = sfence
  $region1: #{tpu_custom_call.1} parent=0
    #allocation4 [shape = 'u8[8192]{0}', space=vmem, size = 0x2000, scoped, tag = 'input window, operand 1, single buffered']
    #allocation5 [shape = 's32[1]{0}', space=sflag, size = 0x4, scoped, tag = 'scoped memory for tpu_custom_call.1']
    #allocation6 [shape = 's32[1]{0}', space=sflag, size = 0x4, scoped, tag = 'scoped memory for tpu_custom_call.1']
    #allocation7 [shape = 'u8[8192]{0}', space=vmem, size = 0x2000, scoped, tag = 'input window, operand 2, single buffered']
    #allocation8 [shape = 's32[1]{0}', space=sflag, size = 0x4, scoped, tag = 'scoped memory for tpu_custom_call.1']
    #allocation9 [shape = 'u8[8192]{0}', space=vmem, size = 0x2000, scoped, tag = 'output window, operand 0, single buffered']
    %12 = vsyncpa [#allocation5], 0
    %13 = vsyncpa [#allocation8], 0
    %14 = vsyncpa [#allocation6], 0
    // Predicated region
    $region2: #{tpu_custom_call.1} parent=1 // pred_check
      _
    $region3: #{tpu_custom_call.1} parent=1 // pred_check_branch
      %16 = sbr.rel (0) target = $region5
    $region4: #{tpu_custom_call.1} parent=1 // pred_region
      %s18 = ssub.s32 256, 256
      %19 = vsyncadd [#allocation5], %s18
      %s21 = sshll.u32 [#allocation4], 4
      %s22 = int_to_ptr.vmem [resolvable:$true] %s21
      %24 = dma.hbm_to_vmem [thread:$0]  %s1, 256, %s22, [#allocation5]
    $region5: #{tpu_custom_call.1} parent=1 // pred_fallthru
      _
    // Predicated region
    $region6: #{tpu_custom_call.1} parent=1 // pred_check
      _
    $region7: #{tpu_custom_call.1} parent=1 // pred_check_branch
      %26 = sbr.rel (0) target = $region9
    $region8: #{tpu_custom_call.1} parent=1 // pred_region
      %s28 = ssub.s32 256, 256
      %29 = vsyncadd [#allocation8], %s28
      %s31 = sshll.u32 [#allocation7], 4
      %s32 = int_to_ptr.vmem [resolvable:$true] %s31
      %34 = dma.hbm_to_vmem [thread:$0]  %s2, 256, %s32, [#allocation8]
    $region9: #{tpu_custom_call.1} parent=1 // pred_fallthru
      _
    // Predicated region
    $region10: #{tpu_custom_call.1} parent=1 // pred_check
      _
    $region11: #{tpu_custom_call.1} parent=1 // pred_check_branch
      %36 = sbr.rel (0) target = $region13
    $region12: #{tpu_custom_call.1} parent=1 // pred_region
      %37 = dma.done [#allocation5], 256
    $region13: #{tpu_custom_call.1} parent=1 // pred_fallthru
      _
    // Predicated region
    $region14: #{tpu_custom_call.1} parent=1 // pred_check
      _
    $region15: #{tpu_custom_call.1} parent=1 // pred_check_branch
      %39 = sbr.rel (0) target = $region17
    $region16: #{tpu_custom_call.1} parent=1 // pred_region
      %40 = dma.done [#allocation8], 256
    $region17: #{tpu_custom_call.1} parent=1 // pred_fallthru
      _
    %s41 = sld [smem:[#allocation3]]
    %s42 = sld [smem:[#allocation3 + $0x1]]
    %s43 = sld [smem:[#allocation3 + $0x2]]
    %v44 = vld [vmem:[#allocation4] sm:$0xff]
    %v45 = vld [vmem:[#allocation4 + $0x8] sm:$0xff]
    %v46 = vld [vmem:[#allocation7] sm:$0xff]
    %v47 = vld [vmem:[#allocation7 + $0x8] sm:$0xff]
    %v48 = vstv %s41
    %v49 = vmul.f32 %v44, %v48
    %v50 = vmul.f32 %v45, %v48
    %v51 = vstv %s42
    %v52 = vmul.f32 %v46, %v51
    %v53 = vmul.f32 %v47, %v51
    %v54 = vadd.f32 %v49, %v52
    %v55 = vadd.f32 %v50, %v53
    %v56 = vstv %s43
    %v57 = vadd.f32 %v54, %v56
    %v58 = vadd.f32 %v55, %v56
    %v59 = vmul.f32 %v57, 0.5
    %v60 = vmul.f32 %v58, 0.5
    %v61 = vtanh.pop %v59
    %v62 = vtanh.pop %v60
    %v63 = vmul.f32 %v61, 0.5
    %v64 = vmul.f32 %v62, 0.5
    %v65 = vadd.f32 %v63, 0.5
    %v66 = vadd.f32 %v64, 0.5
    %67 = vst [vmem:[#allocation9] sm:$0xff] %v65
    %68 = vst [vmem:[#allocation9 + $0x8] sm:$0xff] %v66
    // Predicated region
    $region18: #{tpu_custom_call.1} parent=1 // pred_check
      _
    $region19: #{tpu_custom_call.1} parent=1 // pred_check_branch
      %70 = sbr.rel (0) target = $region21
    $region20: #{tpu_custom_call.1} parent=1 // pred_region
      %s72 = ssub.s32 256, 256
      %73 = vsyncadd [#allocation6], %s72
      %s75 = sshll.u32 [#allocation9], 4
      %s76 = int_to_ptr.vmem [resolvable:$true] %s75
      %78 = dma.vmem_to_hbm [thread:$0]  %s76, 256, %s3, [#allocation6]
    $region21: #{tpu_custom_call.1} parent=1 // pred_fallthru
      _
    // Predicated region
    $region22: #{tpu_custom_call.1} parent=1 // pred_check
      _
    $region23: #{tpu_custom_call.1} parent=1 // pred_check_branch
      %80 = sbr.rel (0) target = $region25
    $region24: #{tpu_custom_call.1} parent=1 // pred_region
      %81 = dma.done [#allocation6], 256
    $region25: #{tpu_custom_call.1} parent=1 // pred_fallthru
      _
    %82 = vsyncpa [#allocation5], 1
    %83 = vsyncpa [#allocation8], 1
    %84 = vsyncpa [#allocation6], 1

</llo_original>
